<compile_context>
chip_gen: v7x
topology: tpu7x:2x2x1
jax: 0.10.0
libtpu: 0.0.40
codegen_flags: <defaults>
</compile_context>

<pallas_src>
import functools

import jax
import jax.numpy as jnp
from jax.experimental import pallas as pl
from jax.experimental.pallas import tpu as pltpu

LANE = 128  # lane width / hidden-feature padding target


def _pad_to(n, m):
    return ((n + m - 1) // m) * m


def _bf16_activation_default():
    """bf16 tanh/intermediates only on chips with bf16 VPU/EUP (v6e, v7x)."""
    try:
        kind = jax.devices()[0].device_kind.lower()
    except Exception:
        return False
    return not any(t in kind for t in ("v2", "v3", "v4", "v5"))


def mlp_kernel(n_linear, in_dim, bf16_act, x_ref, w1_ref, w_rest_ref, b_ref, out_ref):
    """Full MLP on one batch tile.

    x_ref:      (tile_b, in_dim)                 f32  (unpadded coordinates)
    w1_ref:     (8, LANE)                        f32  (layer-1 weight, pre-transposed,
                                                       rows 0..in_dim-1 are real)
    w_rest_ref: (n_linear-1, LANE, LANE)         bf16 (layers 2..n, pre-transposed)
    b_ref:      (n_linear, 1, LANE)              f32
    out_ref:    (tile_b, out_pad)                f32  (out_pad <= 8 typically)
    """
    b_all = b_ref[...]                      # (n_linear, 1, LANE) f32
    x = x_ref[...]                          # (tile_b, in_dim)    f32
    w1 = w1_ref[...]                        # (8, LANE)           f32

    # Layer 1 on the VPU (tiny contraction dim -> broadcast multiplies, all f32).
    h = x[:, 0:1] * w1[0:1, :]
    for k in range(1, in_dim):
        h = h + x[:, k:k + 1] * w1[k:k + 1, :]
    h = h + b_all[0]                        # (tile_b, LANE) f32

    # Hidden / output layers: tanh then bf16-operand MXU matmul with f32 accumulate.
    for i in range(1, n_linear):
        if bf16_act:
            h = jnp.tanh(h.astype(jnp.bfloat16))       # bf16 EUP (v6e/v7x)
        else:
            h = jnp.tanh(h).astype(jnp.bfloat16)       # f32 EUP, cast for the MXU (v5e)
        h = jnp.dot(h, w_rest_ref[i - 1],
                    preferred_element_type=jnp.float32) + b_all[i]

    # Narrow store: only the first out_pad lanes are written back to HBM.
    out_ref[...] = h[:, :out_ref.shape[-1]].astype(out_ref.dtype)


def prepare_params(weights, biases):
    """Pad / pre-transpose / stack parameters once (outside the hot forward call).

    weights[i]: (out_i, in_i) float32 (PyTorch nn.Linear convention).
    biases[i]:  (out_i,)      float32.
    """
    n_linear = len(weights)
    assert n_linear >= 2, "expect at least two Linear layers ([in, hidden..., out])"
    in_dim = weights[0].shape[1]
    out_dim = weights[-1].shape[0]
    assert in_dim <= 8, "layer-1 VPU path expects PINN-style coordinate inputs (<= 8 dims)"
    for w in weights:
        assert w.shape[0] <= LANE and w.shape[1] <= LANE, "layer width must be <= 128"

    # First layer weight: (8, LANE) f32, pre-transposed (rows 0..in_dim-1 real).
    o0, i0 = weights[0].shape
    w1 = jnp.zeros((8, LANE), jnp.float32).at[:i0, :o0].set(weights[0].T)

    # Remaining layers stacked: (n_linear-1, LANE, LANE) bf16 (pre-transposed).
    n_rest = n_linear - 1
    w_rest = jnp.zeros((n_rest, LANE, LANE), jnp.float32)
    for i in range(1, n_linear):
        o, k = weights[i].shape
        w_rest = w_rest.at[i - 1, :k, :o].set(weights[i].T)
    w_rest = w_rest.astype(jnp.bfloat16)

    # Biases stacked: (n_linear, 1, LANE) f32.
    b_all = jnp.zeros((n_linear, 1, LANE), jnp.float32)
    for i, b in enumerate(biases):
        b_all = b_all.at[i, 0, :b.shape[0]].set(b)

    out_pad = _pad_to(out_dim, 8)
    return {"n_linear": n_linear, "in_dim": in_dim, "out_dim": out_dim,
            "out_pad": out_pad, "w1": w1, "w_rest": w_rest, "b_all": b_all}


def poisson_pinn_forward(x, params, *, target_tile=2048, bf16_act=None):
    """x: (batch, in_dim) f32  ->  (batch, out_dim) f32 == net(x)."""
    n_linear = params["n_linear"]
    in_dim = params["in_dim"]
    out_dim = params["out_dim"]
    out_pad = params["out_pad"]
    n_rest = params["w_rest"].shape[0]
    batch = x.shape[0]
    assert x.shape[1] == in_dim

    if bf16_act is None:
        bf16_act = _bf16_activation_default()

    # Batch tiling: pad rows only to a multiple of 8 (sublane), split into enough
    # grid steps to (a) amortize per-step overhead (target_tile rows per step) and
    # (b) give both v7x TensorCores balanced "parallel" work on mid/large batches.
    batch8 = _pad_to(max(batch, 8), 8)
    n_steps = max(1, pl.cdiv(batch8, target_tile), min(4, batch8 // 512))
    tile_b = _pad_to(pl.cdiv(batch8, n_steps), 8)
    batch_p = tile_b * n_steps

    if batch_p != batch:
        x_in = jnp.zeros((batch_p, in_dim), x.dtype).at[:batch].set(x)
    else:
        x_in = x

    out = pl.pallas_call(
        functools.partial(mlp_kernel, n_linear, in_dim, bf16_act),
        out_shape=jax.ShapeDtypeStruct((batch_p, out_pad), jnp.float32),
        grid_spec=pltpu.PrefetchScalarGridSpec(
            num_scalar_prefetch=0,
            grid=(n_steps,),
            in_specs=[
                pl.BlockSpec((tile_b, in_dim), lambda i: (i, 0)),            # x tile (f32)
                pl.BlockSpec((8, LANE), lambda i: (0, 0)),                   # W1 (f32)
                pl.BlockSpec((n_rest, LANE, LANE), lambda i: (0, 0, 0)),     # W2..Wn (bf16)
                pl.BlockSpec((n_linear, 1, LANE), lambda i: (0, 0, 0)),      # biases (f32)
            ],
            out_specs=pl.BlockSpec((tile_b, out_pad), lambda i: (i, 0)),
        ),
        compiler_params=pltpu.CompilerParams(
            dimension_semantics=("parallel",),
        ),
    )(x_in, params["w1"], params["w_rest"], params["b_all"])

    return out[:batch, :out_dim]


def init_linear_params(key, layers):
    """Deterministic PyTorch-style init: U(-1/sqrt(fan_in), 1/sqrt(fan_in))."""
    weights, biases = [], []
    for i in range(len(layers) - 1):
        fan_in, fan_out = layers[i], layers[i + 1]
        key, kw, kb = jax.random.split(key, 3)
        bound = 1.0 / jnp.sqrt(fan_in)
        w = jax.random.uniform(kw, (fan_out, fan_in), jnp.float32, -bound, bound)
        b = jax.random.uniform(kb, (fan_out,), jnp.float32, -bound, bound)
        weights.append(w)
        biases.append(b)
    return weights, biases


def reference_forward(x, weights, biases):
    h = x
    n = len(weights)
    for i, (w, b) in enumerate(zip(weights, biases)):
        h = h @ w.T + b
        if i < n - 1:
            h = jnp.tanh(h)
    return h


if __name__ == "__main__":
    # PoissonPINN with layers = [1, 32, 32, 1]; x has shape (batch, 1).
    layers = [1, 32, 32, 1]
    batch = 64

    key = jax.random.PRNGKey(0)
    key, kx = jax.random.split(key)
    x = jax.random.uniform(kx, (batch, 1), jnp.float32)  # collocation points in [0, 1]

    weights, biases = init_linear_params(key, layers)

    params = prepare_params(weights, biases)             # one-time padding/stacking
    u = poisson_pinn_forward(x, params)                  # demo batch -> single tile, grid=(1,)
    u = jax.block_until_ready(u)

    u_ref = reference_forward(x, weights, biases)        # pure-f32 reference
    assert u.shape == (batch, 1)
    # Hidden-layer weights/activations are bf16 MXU operands (f32 accumulate, f32 x path),
    # so loosen tolerance slightly vs the pure-f32 reference.
    assert jnp.allclose(u, u_ref, atol=2e-2, rtol=2e-2), "mismatch vs reference"

    # TODO(synk): compute_residual / loss / train_model need autodiff through the net and
    # a training loop; this kernel covers PoissonPINN.forward exactly.
    print("KERNEL_OK")
</pallas_src>

<mosaic_0001>
module attributes {stable_mosaic.version = 11 : i64} {
  func.func @mlp_kernel(%arg0: i32, %arg1: memref<64x1xf32, #tpu.memory_space<vmem>>, %arg2: memref<8x128xf32, #tpu.memory_space<vmem>>, %arg3: memref<2x128x128xbf16, #tpu.memory_space<vmem>>, %arg4: memref<3x1x128xf32, #tpu.memory_space<vmem>>, %arg5: memref<64x8xf32, #tpu.memory_space<vmem>>) attributes {dimension_semantics = [#tpu.dimension_semantics<parallel>], iteration_bounds = array<i64: 1>, scalar_prefetch = 0 : i64, scratch_operands = 0 : i64, tpu.core_type = #tpu.core_type<tc>, window_params = [{transform_indices = @transform_0, window_bounds = array<i64: 64, 1>}, {pipeline_mode = #tpu.pipeline_mode<synchronous>, transform_indices = @transform_1, window_bounds = array<i64: 8, 128>}, {pipeline_mode = #tpu.pipeline_mode<synchronous>, transform_indices = @transform_2, window_bounds = array<i64: 2, 128, 128>}, {pipeline_mode = #tpu.pipeline_mode<synchronous>, transform_indices = @transform_3, window_bounds = array<i64: 3, 1, 128>}, {transform_indices = @transform_4, window_bounds = array<i64: 64, 8>}]} {
    %c0 = arith.constant 0 : index
    %c0_0 = arith.constant 0 : index
    %c0_1 = arith.constant 0 : index
    %0 = vector.load %arg4[%c0, %c0_0, %c0_1] : memref<3x1x128xf32, #tpu.memory_space<vmem>>, vector<3x1x128xf32>
    %c0_2 = arith.constant 0 : index
    %c0_3 = arith.constant 0 : index
    %1 = vector.load %arg1[%c0_2, %c0_3] : memref<64x1xf32, #tpu.memory_space<vmem>>, vector<64x1xf32>
    %c0_4 = arith.constant 0 : index
    %c0_5 = arith.constant 0 : index
    %2 = vector.load %arg2[%c0_4, %c0_5] : memref<8x128xf32, #tpu.memory_space<vmem>>, vector<8x128xf32>
    %3 = vector.extract_strided_slice %2 {offsets = [0, 0], sizes = [1, 128], strides = [1, 1]} : vector<8x128xf32> to vector<1x128xf32>
    %4 = vector.broadcast %1 : vector<64x1xf32> to vector<64x128xf32>
    %5 = vector.broadcast %3 : vector<1x128xf32> to vector<64x128xf32>
    %6 = arith.mulf %4, %5 : vector<64x128xf32>
    %7 = vector.extract_strided_slice %0 {offsets = [0, 0, 0], sizes = [1, 1, 128], strides = [1, 1, 1]} : vector<3x1x128xf32> to vector<1x1x128xf32>
    %8 = vector.shape_cast %7 : vector<1x1x128xf32> to vector<1x128xf32>
    %9 = vector.broadcast %8 : vector<1x128xf32> to vector<64x128xf32>
    %10 = arith.addf %6, %9 : vector<64x128xf32>
    %11 = arith.truncf %10 : vector<64x128xf32> to vector<64x128xbf16>
    %12 = math.tanh %11 : vector<64x128xbf16>
    %c0_6 = arith.constant 0 : index
    %c0_7 = arith.constant 0 : index
    %c0_8 = arith.constant 0 : index
    %13 = vector.load %arg3[%c0_6, %c0_7, %c0_8] : memref<2x128x128xbf16, #tpu.memory_space<vmem>>, vector<1x128x128xbf16>
    %14 = vector.shape_cast %13 : vector<1x128x128xbf16> to vector<128x128xbf16>
    %cst = arith.constant dense<0.000000e+00> : vector<64x128xf32>
    %15 = tpu.matmul %12, %14, %cst {dimension_numbers = #tpu.dot_dimension_numbers<[1], [0], [0], [1], [0, 0, 1, 1], [], []>} : vector<64x128xbf16>, vector<128x128xbf16>, vector<64x128xf32> -> vector<64x128xf32>
    %16 = vector.extract_strided_slice %0 {offsets = [1, 0, 0], sizes = [1, 1, 128], strides = [1, 1, 1]} : vector<3x1x128xf32> to vector<1x1x128xf32>
    %17 = vector.shape_cast %16 : vector<1x1x128xf32> to vector<1x128xf32>
    %18 = vector.broadcast %17 : vector<1x128xf32> to vector<64x128xf32>
    %19 = arith.addf %15, %18 : vector<64x128xf32>
    %20 = arith.truncf %19 : vector<64x128xf32> to vector<64x128xbf16>
    %21 = math.tanh %20 : vector<64x128xbf16>
    %c1 = arith.constant 1 : index
    %c0_9 = arith.constant 0 : index
    %c0_10 = arith.constant 0 : index
    %22 = vector.load %arg3[%c1, %c0_9, %c0_10] : memref<2x128x128xbf16, #tpu.memory_space<vmem>>, vector<1x128x128xbf16>
    %23 = vector.shape_cast %22 : vector<1x128x128xbf16> to vector<128x128xbf16>
    %cst_11 = arith.constant dense<0.000000e+00> : vector<64x128xf32>
    %24 = tpu.matmul %21, %23, %cst_11 {dimension_numbers = #tpu.dot_dimension_numbers<[1], [0], [0], [1], [0, 0, 1, 1], [], []>} : vector<64x128xbf16>, vector<128x128xbf16>, vector<64x128xf32> -> vector<64x128xf32>
    %25 = vector.extract_strided_slice %0 {offsets = [2, 0, 0], sizes = [1, 1, 128], strides = [1, 1, 1]} : vector<3x1x128xf32> to vector<1x1x128xf32>
    %26 = vector.shape_cast %25 : vector<1x1x128xf32> to vector<1x128xf32>
    %27 = vector.broadcast %26 : vector<1x128xf32> to vector<64x128xf32>
    %28 = arith.addf %24, %27 : vector<64x128xf32>
    %29 = vector.extract_strided_slice %28 {offsets = [0, 0], sizes = [64, 8], strides = [1, 1]} : vector<64x128xf32> to vector<64x8xf32>
    %c0_12 = arith.constant 0 : index
    %c0_13 = arith.constant 0 : index
    %30 = vector.load %arg5[%c0_12, %c0_13] : memref<64x8xf32, #tpu.memory_space<vmem>>, vector<64x8xf32>
    tpu.vector_store %arg5[%c0_12, %c0_13], %29 {strides = array<i32>} : memref<64x8xf32, #tpu.memory_space<vmem>>, vector<64x8xf32>,
    return
  }
  func.func @transform_0(%arg0: i32) -> (i32, i32) {
    %c0_i32 = arith.constant 0 : i32
    %c0_i32_0 = arith.constant 0 : i32
    return %arg0, %c0_i32 : i32, i32
  }
  func.func @transform_1(%arg0: i32) -> (i32, i32) {
    %c0_i32 = arith.constant 0 : i32
    %c0_i32_0 = arith.constant 0 : i32
    %c0_i32_1 = arith.constant 0 : i32
    return %c0_i32, %c0_i32_0 : i32, i32
  }
  func.func @transform_2(%arg0: i32) -> (i32, i32, i32) {
    %c0_i32 = arith.constant 0 : i32
    %c0_i32_0 = arith.constant 0 : i32
    %c0_i32_1 = arith.constant 0 : i32
    %c0_i32_2 = arith.constant 0 : i32
    return %c0_i32, %c0_i32_0, %c0_i32_1 : i32, i32, i32
  }
  func.func @transform_3(%arg0: i32) -> (i32, i32, i32) {
    %c0_i32 = arith.constant 0 : i32
    %c0_i32_0 = arith.constant 0 : i32
    %c0_i32_1 = arith.constant 0 : i32
    %c0_i32_2 = arith.constant 0 : i32
    return %c0_i32, %c0_i32_0, %c0_i32_1 : i32, i32, i32
  }
  func.func @transform_4(%arg0: i32) -> (i32, i32) {
    %c0_i32 = arith.constant 0 : i32
    %c0_i32_0 = arith.constant 0 : i32
    return %arg0, %c0_i32 : i32, i32
  }
}

</mosaic_0001>

<llo_original>
// kernel: tpu_custom_call.1
$region0: #{tpu_custom_call.1}
  #allocation0 [shape = 'u32[]', space=smem, size = 0x4, offset = 0x4, fixed_abs, tag = 'smem constant byte address 0x4 - core index']
  #allocation1 [shape = 'u32[144,128]{1,0:T(1,128)}', space=vmem, size = 0x12000, scoped, tag = 'internal scratch']
  %s0 = inlined_call_operand.vmem [shape: f32[64,1], index: 0, kind: input, shape index: {}]
  %s1 = inlined_call_operand.vmem [shape: f32[8,128], index: 1, kind: input, shape index: {}]
  %s2 = inlined_call_operand.hbm [shape: bf16[2,128,128], index: 2, kind: input, shape index: {}]
  %s3 = inlined_call_operand.vmem [shape: f32[3,1,128], index: 3, kind: input, shape index: {}]
  %s4 = inlined_call_operand.vmem [shape: f32[64,8], index: 4, kind: output, shape index: {}]
  %s5 = sld [smem:[#allocation0]]
  $region30: #{tpu_custom_call.1} parent=0
    _
  %s7 = ssub.s32 1, %s5
  %s8 = scalar_select 0, %s7, %s5
  $region1: #{tpu_custom_call.1} parent=0
    #allocation2 [shape = 'u8[65536]{0}', space=vmem, size = 0x10000, scoped, tag = 'input window, operand 2, single buffered']
    #allocation3 [shape = 's32[1]{0}', space=sflag, size = 0x4, scoped, tag = 'scoped memory for tpu_custom_call.1']
    %9 = vsyncpa [#allocation3], 0
    // Predicated region
    $region2: #{tpu_custom_call.1} parent=1 // pred_check
      _
    $region3: #{tpu_custom_call.1} parent=1 // pred_check_branch
      %11 = sbr.rel (0) target = $region5
    $region4: #{tpu_custom_call.1} parent=1 // pred_region
      _
    $region5: #{tpu_custom_call.1} parent=1 // pred_fallthru
      _
    // Predicated region
    $region6: #{tpu_custom_call.1} parent=1 // pred_check
      _
    $region7: #{tpu_custom_call.1} parent=1 // pred_check_branch
      %13 = sbr.rel (0) target = $region9
    $region8: #{tpu_custom_call.1} parent=1 // pred_region
      _
    $region9: #{tpu_custom_call.1} parent=1 // pred_fallthru
      _
    // Predicated region
    $region10: #{tpu_custom_call.1} parent=1 // pred_check
      _
    $region11: #{tpu_custom_call.1} parent=1 // pred_check_branch
      %15 = sbr.rel (0) target = $region13
    $region12: #{tpu_custom_call.1} parent=1 // pred_region
      %s17 = ssub.s32 2048, 2048
      %18 = vsyncadd [#allocation3], %s17
      %s19 = sshll.u32 [#allocation2], 4
      %s20 = int_to_ptr.vmem [resolvable:$true] %s19
      %25 = dma.hbm_to_vmem [thread:$0]  %s2, 2048, %s20, [#allocation3], 64, 64, 4
    $region13: #{tpu_custom_call.1} parent=1 // pred_fallthru
      _
    // Predicated region
    $region14: #{tpu_custom_call.1} parent=1 // pred_check
      _
    $region15: #{tpu_custom_call.1} parent=1 // pred_check_branch
      %27 = sbr.rel (0) target = $region17
    $region16: #{tpu_custom_call.1} parent=1 // pred_region
      _
    $region17: #{tpu_custom_call.1} parent=1 // pred_fallthru
      _
    // Predicated region
    $region18: #{tpu_custom_call.1} parent=1 // pred_check
      _
    $region19: #{tpu_custom_call.1} parent=1 // pred_check_branch
      %29 = sbr.rel (0) target = $region21
    $region20: #{tpu_custom_call.1} parent=1 // pred_region
      %30 = dma.done [#allocation3], 2048
    $region21: #{tpu_custom_call.1} parent=1 // pred_fallthru
      _
    %v32 = vld [vmem:[%s3] sm:$0x1]
    %v33 = vld [vmem:[%s3 + $0x1] sm:$0x1]
    %v34 = vld [vmem:[%s3 + $0x2] sm:$0x1]
    %v35 = vld [vmem:[%s0] sm:$0xff]
    %v36 = vld [vmem:[%s0 + $0x8] sm:$0xff]
    %v37 = vld [vmem:[%s0 + $0x10] sm:$0xff]
    %v38 = vld [vmem:[%s0 + $0x18] sm:$0xff]
    %v39 = vld [vmem:[%s0 + $0x20] sm:$0xff]
    %v40 = vld [vmem:[%s0 + $0x28] sm:$0xff]
    %v41 = vld [vmem:[%s0 + $0x30] sm:$0xff]
    %v42 = vld [vmem:[%s0 + $0x38] sm:$0xff]
    %v43 = vld [vmem:[%s1] sm:$0xff]
    %45 = vset.pattern.permute.xlu0 0
    %46 = vperm.xlu0 %45, %v35
    %v47 = vpop.permute.xlu0 %46
    %50 = vset.pattern.permute.xlu0 0
    %51 = vperm.xlu0 %50, %v36
    %v52 = vpop.permute.xlu0 %51
    %55 = vset.pattern.permute.xlu0 0
    %56 = vperm.xlu0 %55, %v37
    %v57 = vpop.permute.xlu0 %56
    %60 = vset.pattern.permute.xlu0 0
    %61 = vperm.xlu0 %60, %v38
    %v62 = vpop.permute.xlu0 %61
    %65 = vset.pattern.permute.xlu0 0
    %66 = vperm.xlu0 %65, %v39
    %v67 = vpop.permute.xlu0 %66
    %70 = vset.pattern.permute.xlu0 0
    %71 = vperm.xlu0 %70, %v40
    %v72 = vpop.permute.xlu0 %71
    %75 = vset.pattern.permute.xlu0 0
    %76 = vperm.xlu0 %75, %v41
    %v77 = vpop.permute.xlu0 %76
    %80 = vset.pattern.permute.xlu0 0
    %81 = vperm.xlu0 %80, %v42
    %v82 = vpop.permute.xlu0 %81
    %v84 = vlaneseq
    %v85 = vshrl.u32 %v84, 7
    %v86 = vsub.s32 0, %v85
    %v87 = vrot.slane %v43, %v86
    %v88 = vmul.f32 %v47, %v87
    %v89 = vmul.f32 %v52, %v87
    %v90 = vmul.f32 %v57, %v87
    %v91 = vmul.f32 %v62, %v87
    %v92 = vmul.f32 %v67, %v87
    %v93 = vmul.f32 %v72, %v87
    %v94 = vmul.f32 %v77, %v87
    %v95 = vmul.f32 %v82, %v87
    %v97 = vlaneseq
    %v98 = vshrl.u32 %v97, 7
    %v99 = vsub.s32 0, %v98
    %v100 = vrot.slane %v32, %v99
    %v102 = vadd.f32 %v88, %v100
    %v103 = vadd.f32 %v89, %v100
    %v104 = vadd.f32 %v90, %v100
    %v105 = vadd.f32 %v91, %v100
    %v106 = vadd.f32 %v92, %v100
    %v107 = vadd.f32 %v93, %v100
    %v108 = vadd.f32 %v94, %v100
    %v109 = vadd.f32 %v95, %v100
    %v110 = vpack.c.bf16 %v103, %v102
    %v111 = vpack.c.bf16 %v105, %v104
    %v112 = vpack.c.bf16 %v107, %v106
    %v113 = vpack.c.bf16 %v109, %v108
    %v114 = vtanh.bf16.pop %v110
    %v115 = vtanh.bf16.pop %v111
    %v116 = vtanh.bf16.pop %v112
    %v117 = vtanh.bf16.pop %v113
    %v118 = vld [vmem:[#allocation2] sm:$0xf]
    %v119 = vld [vmem:[#allocation2 + $0x4] sm:$0xf]
    %v120 = vld [vmem:[#allocation2 + $0x8] sm:$0xf]
    %v121 = vld [vmem:[#allocation2 + $0xc] sm:$0xf]
    %v122 = vld [vmem:[#allocation2 + $0x10] sm:$0xf]
    %v123 = vld [vmem:[#allocation2 + $0x14] sm:$0xf]
    %v124 = vld [vmem:[#allocation2 + $0x18] sm:$0xf]
    %v125 = vld [vmem:[#allocation2 + $0x1c] sm:$0xf]
    %v126 = vld [vmem:[#allocation2 + $0x20] sm:$0xf]
    %v127 = vld [vmem:[#allocation2 + $0x24] sm:$0xf]
    %v128 = vld [vmem:[#allocation2 + $0x28] sm:$0xf]
    %v129 = vld [vmem:[#allocation2 + $0x2c] sm:$0xf]
    %v130 = vld [vmem:[#allocation2 + $0x30] sm:$0xf]
    %v131 = vld [vmem:[#allocation2 + $0x34] sm:$0xf]
    %v132 = vld [vmem:[#allocation2 + $0x38] sm:$0xf]
    %v133 = vld [vmem:[#allocation2 + $0x3c] sm:$0xf]
    %v135 = vlaneseq
    %v136 = vshrl.u32 %v135, 7
    %v137 = vsub.s32 0, %v136
    %v138 = vrot.slane %v33, %v137
    %v156 = vunpack.c.l.b16 %v118
    %v157 = vunpack.c.l.b16 %v119
    %v158 = vunpack.c.l.b16 %v120
    %v159 = vunpack.c.l.b16 %v121
    %v160 = vunpack.c.l.b16 %v122
    %v161 = vunpack.c.l.b16 %v123
    %v162 = vunpack.c.l.b16 %v124
    %v163 = vunpack.c.l.b16 %v125
    %v164 = vunpack.c.l.b16 %v126
    %v165 = vunpack.c.l.b16 %v127
    %v166 = vunpack.c.l.b16 %v128
    %v167 = vunpack.c.l.b16 %v129
    %v168 = vunpack.c.l.b16 %v130
    %v169 = vunpack.c.l.b16 %v131
    %v170 = vunpack.c.l.b16 %v132
    %v171 = vunpack.c.l.b16 %v133
    %v172 = vpack.c.b16 %v157, %v156
    %v173 = vpack.c.b16 %v159, %v158
    %v174 = vpack.c.b16 %v161, %v160
    %v175 = vpack.c.b16 %v163, %v162
    %v176 = vpack.c.b16 %v165, %v164
    %v177 = vpack.c.b16 %v167, %v166
    %v178 = vpack.c.b16 %v169, %v168
    %v179 = vpack.c.b16 %v171, %v170
    %188 = vmatprep.subr.bf16.mxu0 0
    %189 = vmatpush1.bf16.msra.mxu0 %v172
    %190 = vmatprep.subr.bf16.mxu0 0
    %191 = vmatpush1.bf16.msra.mxu0 %v173
    %192 = vmatprep.subr.bf16.mxu0 0
    %193 = vmatpush1.bf16.msra.mxu0 %v174
    %194 = vmatprep.subr.bf16.mxu0 0
    %195 = vmatpush1.bf16.msra.mxu0 %v175
    %196 = vmatprep.subr.bf16.mxu0 0
    %197 = vmatpush1.bf16.msra.mxu0 %v176
    %198 = vmatprep.subr.bf16.mxu0 0
    %199 = vmatpush1.bf16.msra.mxu0 %v177
    %200 = vmatprep.subr.bf16.mxu0 0
    %201 = vmatpush1.bf16.msra.mxu0 %v178
    %202 = vmatprep.subr.bf16.mxu0 0
    %203 = vmatpush1.bf16.msra.mxu0 %v179
    %204 = vmatprep.subr.bf16.mxu0 0
    %205 = vmatpush1.bf16.msra.mxu0 0
    %206 = vmatprep.subr.bf16.mxu0 0
    %207 = vmatpush1.bf16.msra.mxu0 0
    %208 = vmatprep.subr.bf16.mxu0 0
    %209 = vmatpush1.bf16.msra.mxu0 0
    %210 = vmatprep.subr.bf16.mxu0 0
    %211 = vmatpush1.bf16.msra.mxu0 0
    %212 = vmatprep.subr.bf16.mxu0 0
    %213 = vmatpush1.bf16.msra.mxu0 0
    %214 = vmatprep.subr.bf16.mxu0 0
    %215 = vmatpush1.bf16.msra.mxu0 0
    %216 = vmatprep.subr.bf16.mxu0 0
    %217 = vmatpush1.bf16.msra.mxu0 0
    %218 = vmatprep.subr.bf16.mxu0 0
    %219 = vmatpush1.bf16.msra.mxu0 0
    %220 = vmatprep.mubr.bf16.mxu0 0
    %221 = vmatmul.mubr.bf16.gmra.mrb[0].mxu0 %v114
    %v222 = vpop.f32.mrb[0].mxu0
    %v223 = vadd.f32 %v138, %v222
    %v224 = vpop.f32.mrb[0].mxu0
    %v225 = vpop.f32.mrb[0].mxu0
    %v226 = vadd.f32 %v138, %v225
    %v227 = vpop.f32.mrb[0].mxu0
    %228 = vmatprep.mubr.bf16.mxu0 0
    %229 = vmatmul.mubr.bf16.gmra.mrb[0].mxu0 %v115
    %v230 = vpop.f32.mrb[0].mxu0
    %v231 = vadd.f32 %v138, %v230
    %v232 = vpop.f32.mrb[0].mxu0
    %v233 = vpop.f32.mrb[0].mxu0
    %v234 = vadd.f32 %v138, %v233
    %v235 = vpop.f32.mrb[0].mxu0
    %236 = vmatprep.mubr.bf16.mxu0 0
    %237 = vmatmul.mubr.bf16.gmra.mrb[0].mxu0 %v116
    %v238 = vpop.f32.mrb[0].mxu0
    %v239 = vadd.f32 %v138, %v238
    %v240 = vpop.f32.mrb[0].mxu0
    %v241 = vpop.f32.mrb[0].mxu0
    %v242 = vadd.f32 %v138, %v241
    %v243 = vpop.f32.mrb[0].mxu0
    %244 = vmatprep.mubr.bf16.mxu0 0
    %245 = vmatmul.mubr.bf16.gmra.mrb[0].mxu0 %v117
    %v246 = vpop.f32.mrb[0].mxu0
    %v247 = vadd.f32 %v138, %v246
    %v248 = vpop.f32.mrb[0].mxu0
    %v249 = vpop.f32.mrb[0].mxu0
    %v250 = vadd.f32 %v138, %v249
    %v251 = vpop.f32.mrb[0].mxu0
    %252 = vdwg.mxu0
    %v253 = vpack.c.bf16 %v226, %v223
    %v254 = vpack.c.bf16 %v234, %v231
    %v255 = vpack.c.bf16 %v242, %v239
    %v256 = vpack.c.bf16 %v250, %v247
    %v257 = vtanh.bf16.pop %v253
    %v258 = vtanh.bf16.pop %v254
    %v259 = vtanh.bf16.pop %v255
    %v260 = vtanh.bf16.pop %v256
    %s261 = scalar_lea.vmem [#allocation2], 64
    %v262 = vld [vmem:[%s261] sm:$0xf]
    %v263 = vld [vmem:[%s261 + $0x4] sm:$0xf]
    %v264 = vld [vmem:[%s261 + $0x8] sm:$0xf]
    %v265 = vld [vmem:[%s261 + $0xc] sm:$0xf]
    %v266 = vld [vmem:[%s261 + $0x10] sm:$0xf]
    %v267 = vld [vmem:[%s261 + $0x14] sm:$0xf]
    %v268 = vld [vmem:[%s261 + $0x18] sm:$0xf]
    %v269 = vld [vmem:[%s261 + $0x1c] sm:$0xf]
    %v270 = vld [vmem:[%s261 + $0x20] sm:$0xf]
    %v271 = vld [vmem:[%s261 + $0x24] sm:$0xf]
    %v272 = vld [vmem:[%s261 + $0x28] sm:$0xf]
    %v273 = vld [vmem:[%s261 + $0x2c] sm:$0xf]
    %v274 = vld [vmem:[%s261 + $0x30] sm:$0xf]
    %v275 = vld [vmem:[%s261 + $0x34] sm:$0xf]
    %v276 = vld [vmem:[%s261 + $0x38] sm:$0xf]
    %v277 = vld [vmem:[%s261 + $0x3c] sm:$0xf]
    %v279 = vlaneseq
    %v280 = vshrl.u32 %v279, 7
    %v281 = vsub.s32 0, %v280
    %v282 = vrot.slane %v34, %v281
    %v300 = vunpack.c.l.b16 %v262
    %v301 = vunpack.c.l.b16 %v263
    %v302 = vunpack.c.l.b16 %v264
    %v303 = vunpack.c.l.b16 %v265
    %v304 = vunpack.c.l.b16 %v266
    %v305 = vunpack.c.l.b16 %v267
    %v306 = vunpack.c.l.b16 %v268
    %v307 = vunpack.c.l.b16 %v269
    %v308 = vunpack.c.l.b16 %v270
    %v309 = vunpack.c.l.b16 %v271
    %v310 = vunpack.c.l.b16 %v272
    %v311 = vunpack.c.l.b16 %v273
    %v312 = vunpack.c.l.b16 %v274
    %v313 = vunpack.c.l.b16 %v275
    %v314 = vunpack.c.l.b16 %v276
    %v315 = vunpack.c.l.b16 %v277
    %v316 = vpack.c.b16 %v301, %v300
    %v317 = vpack.c.b16 %v303, %v302
    %v318 = vpack.c.b16 %v305, %v304
    %v319 = vpack.c.b16 %v307, %v306
    %v320 = vpack.c.b16 %v309, %v308
    %v321 = vpack.c.b16 %v311, %v310
    %v322 = vpack.c.b16 %v313, %v312
    %v323 = vpack.c.b16 %v315, %v314
    %332 = vmatprep.subr.bf16.mxu0 0
    %333 = vmatpush1.bf16.msra.mxu0 %v316
    %334 = vmatprep.subr.bf16.mxu0 0
    %335 = vmatpush1.bf16.msra.mxu0 %v317
    %336 = vmatprep.subr.bf16.mxu0 0
    %337 = vmatpush1.bf16.msra.mxu0 %v318
    %338 = vmatprep.subr.bf16.mxu0 0
    %339 = vmatpush1.bf16.msra.mxu0 %v319
    %340 = vmatprep.subr.bf16.mxu0 0
    %341 = vmatpush1.bf16.msra.mxu0 %v320
    %342 = vmatprep.subr.bf16.mxu0 0
    %343 = vmatpush1.bf16.msra.mxu0 %v321
    %344 = vmatprep.subr.bf16.mxu0 0
    %345 = vmatpush1.bf16.msra.mxu0 %v322
    %346 = vmatprep.subr.bf16.mxu0 0
    %347 = vmatpush1.bf16.msra.mxu0 %v323
    %348 = vmatprep.subr.bf16.mxu0 0
    %349 = vmatpush1.bf16.msra.mxu0 0
    %350 = vmatprep.subr.bf16.mxu0 0
    %351 = vmatpush1.bf16.msra.mxu0 0
    %352 = vmatprep.subr.bf16.mxu0 0
    %353 = vmatpush1.bf16.msra.mxu0 0
    %354 = vmatprep.subr.bf16.mxu0 0
    %355 = vmatpush1.bf16.msra.mxu0 0
    %356 = vmatprep.subr.bf16.mxu0 0
    %357 = vmatpush1.bf16.msra.mxu0 0
    %358 = vmatprep.subr.bf16.mxu0 0
    %359 = vmatpush1.bf16.msra.mxu0 0
    %360 = vmatprep.subr.bf16.mxu0 0
    %361 = vmatpush1.bf16.msra.mxu0 0
    %362 = vmatprep.subr.bf16.mxu0 0
    %363 = vmatpush1.bf16.msra.mxu0 0
    %364 = vmatprep.mubr.bf16.mxu0 0
    %365 = vmatmul.mubr.bf16.gmra.mrb[0].mxu0 %v257
    %v366 = vpop.f32.mrb[0].mxu0
    %v367 = vadd.f32 %v282, %v366
    %v368 = vpop.f32.mrb[0].mxu0
    %v369 = vpop.f32.mrb[0].mxu0
    %v370 = vadd.f32 %v282, %v369
    %v371 = vpop.f32.mrb[0].mxu0
    %372 = vmatprep.mubr.bf16.mxu0 0
    %373 = vmatmul.mubr.bf16.gmra.mrb[0].mxu0 %v258
    %v374 = vpop.f32.mrb[0].mxu0
    %v375 = vadd.f32 %v282, %v374
    %v376 = vpop.f32.mrb[0].mxu0
    %v377 = vpop.f32.mrb[0].mxu0
    %v378 = vadd.f32 %v282, %v377
    %v379 = vpop.f32.mrb[0].mxu0
    %380 = vmatprep.mubr.bf16.mxu0 0
    %381 = vmatmul.mubr.bf16.gmra.mrb[0].mxu0 %v259
    %v382 = vpop.f32.mrb[0].mxu0
    %v383 = vadd.f32 %v282, %v382
    %v384 = vpop.f32.mrb[0].mxu0
    %v385 = vpop.f32.mrb[0].mxu0
    %v386 = vadd.f32 %v282, %v385
    %v387 = vpop.f32.mrb[0].mxu0
    %388 = vmatprep.mubr.bf16.mxu0 0
    %389 = vmatmul.mubr.bf16.gmra.mrb[0].mxu0 %v260
    %v390 = vpop.f32.mrb[0].mxu0
    %v391 = vadd.f32 %v282, %v390
    %v392 = vpop.f32.mrb[0].mxu0
    %v393 = vpop.f32.mrb[0].mxu0
    %v394 = vadd.f32 %v282, %v393
    %v395 = vpop.f32.mrb[0].mxu0
    %396 = vdwg.mxu0
    %vm397 = vcmask 64512
    %398 = vst.msk [vmem:[%s4] sm:$0xff] %vm397, %v367
    %399 = vst.msk [vmem:[%s4 + $0x8] sm:$0xff] %vm397, %v370
    %400 = vst.msk [vmem:[%s4 + $0x10] sm:$0xff] %vm397, %v375
    %401 = vst.msk [vmem:[%s4 + $0x18] sm:$0xff] %vm397, %v378
    %402 = vst.msk [vmem:[%s4 + $0x20] sm:$0xff] %vm397, %v383
    %403 = vst.msk [vmem:[%s4 + $0x28] sm:$0xff] %vm397, %v386
    %404 = vst.msk [vmem:[%s4 + $0x30] sm:$0xff] %vm397, %v391
    %405 = vst.msk [vmem:[%s4 + $0x38] sm:$0xff] %vm397, %v394
    // Predicated region
    $region22: #{tpu_custom_call.1} parent=1 // pred_check
      _
    $region23: #{tpu_custom_call.1} parent=1 // pred_check_branch
      %407 = sbr.rel (0) target = $region25
    $region24: #{tpu_custom_call.1} parent=1 // pred_region
      _
    $region25: #{tpu_custom_call.1} parent=1 // pred_fallthru
      _
    // Predicated region
    $region26: #{tpu_custom_call.1} parent=1 // pred_check
      _
    $region27: #{tpu_custom_call.1} parent=1 // pred_check_branch
      %409 = sbr.rel (0) target = $region29
    $region28: #{tpu_custom_call.1} parent=1 // pred_region
      _
    $region29: #{tpu_custom_call.1} parent=1 // pred_fallthru
      _
    %410 = vsyncpa [#allocation3], 1

</llo_original>
